<compile_context>
chip_gen: v7x
topology: tpu7x:2x2x1
jax: 0.10.0
libtpu: 0.0.40
codegen_flags: <defaults>
</compile_context>

<pallas_src>
import functools

import jax
import jax.numpy as jnp
from jax.experimental import pallas as pl
from jax.experimental.pallas import tpu as pltpu


def _round_up(x, m):
    return (x + m - 1) // m * m


# ----------------------------------------------------------------------------
# Pallas kernel: fused sparse top-k expert FFN + gate-weighted combine
# ----------------------------------------------------------------------------
def _moe_topk_fused_kernel(idx_ref, gates_ref, x_ref, w1_ref, w2_ref, o_ref,
                           *, k: int, residual: bool):
    """Grid = (B,).  For batch b with top-k experts e_j = idx[b, j]:
         h    = GELU(x_b @ [W1_{e0} | ... | W1_{e(k-1)}])      (contraction D)
         h   *= [g_0..g_0 | g_1..g_1 | ...]                    (per-expert gate, f32)
         out  = h @ [W2_{e0}; ...; W2_{e(k-1)}] (+ x_b)        (contraction k*Dffp)
       The whole expert-weight stacks are VMEM-resident (constant block index
       => DMA'd once); the k selected slabs are gathered in-kernel by dynamic
       first-axis indexing and fused into a single 256-wide matmul pair."""
    b = pl.program_id(0)
    dffp = w1_ref.shape[2]

    x_f32 = x_ref[0]                                   # (Rp, D) f32, residual path
    x_bf = x_f32.astype(jnp.bfloat16)                  # cast once per batch block

    # Gather the k selected experts' weights from the resident stacks.
    w1cat = jnp.concatenate(
        [w1_ref[idx_ref[b, j]] for j in range(k)], axis=-1)   # (D, k*Dffp) bf16
    w2cat = jnp.concatenate(
        [w2_ref[idx_ref[b, j]] for j in range(k)], axis=0)    # (k*Dffp, D) bf16

    h = jnp.dot(x_bf, w1cat, preferred_element_type=jnp.float32)   # (Rp, k*Dffp) f32
    # TODO(synk): PyTorch nn.GELU defaults to exact erf; the tanh approximation
    # (jax.nn.gelu default) is used here.
    h = jax.nn.gelu(h)

    # Per-expert gate folded into h in f32 (the fused second matmul sums the
    # expert contributions inside the MXU, so the gate must be applied here).
    gate_row = jnp.concatenate(
        [jnp.full((1, dffp), gates_ref[b, j], jnp.float32) for j in range(k)],
        axis=-1)                                                   # (1, k*Dffp)
    h = (h * gate_row).astype(jnp.bfloat16)

    out = jnp.dot(h, w2cat, preferred_element_type=jnp.float32)    # (Rp, D) f32
    if residual:
        out = out + x_f32                                          # exact f32 residual
    o_ref[0] = out


# ----------------------------------------------------------------------------
# Wrapper around pallas_call
# ----------------------------------------------------------------------------
def moe_topk_combine(top_idx, top_gates, x_r, w1_p, w2_p, *, residual):
    """x_r: [B, R, D] f32; w1_p: [E, D, Dffp] bf16 (d_ff zero-padded to 128);
       w2_p: [E, Dffp, D] bf16; top_idx/top_gates: [B, k].  Returns [B, R, D] f32."""
    B, R, D = x_r.shape
    E, _, Dffp = w1_p.shape
    k = top_idx.shape[1]

    # bf16 MXU LHS prefers a row count that is a multiple of 16 (native (16,128)
    # tile); this is a no-op for the demo shapes (R = L*N = 64).
    Rp = _round_up(R, 16)
    x_in = x_r if Rp == R else jnp.pad(x_r, ((0, 0), (0, Rp - R), (0, 0)))

    out = pl.pallas_call(
        functools.partial(_moe_topk_fused_kernel, k=k, residual=residual),
        out_shape=jax.ShapeDtypeStruct((B, Rp, D), jnp.float32),
        grid_spec=pltpu.PrefetchScalarGridSpec(
            num_scalar_prefetch=1,                     # top_idx -> SMEM
            grid=(B,),                                 # one fused step per batch
            in_specs=[
                pl.BlockSpec(memory_space=pltpu.MemorySpace.SMEM),     # top_gates (B,k)
                pl.BlockSpec((1, Rp, D), lambda b, idx: (b, 0, 0)),    # x_b
                # Whole expert-weight stacks stay VMEM-resident: constant block
                # index => DMA'd once, never re-fetched across the batch grid.
                pl.BlockSpec((E, D, Dffp), lambda b, idx: (0, 0, 0)),  # all W1
                pl.BlockSpec((E, Dffp, D), lambda b, idx: (0, 0, 0)),  # all W2
            ],
            out_specs=pl.BlockSpec((1, Rp, D), lambda b, idx: (b, 0, 0)),
        ),
        # B axis is parallel (megacore / v7x dual-TC sharding).
        # TODO(synk): at production d_model/d_ff sizes add a d_ff tiling grid
        # axis and set vmem_limit_bytes so resident weights fit v7x's 64 MiB.
        compiler_params=pltpu.CompilerParams(
            dimension_semantics=("parallel",)),
    )(top_idx, top_gates, x_in, w1_p, w2_p)

    return out if Rp == R else out[:, :R, :]


# ----------------------------------------------------------------------------
# AdaptiveMultiScale forward (glue in plain JAX, hot path in Pallas)
# ----------------------------------------------------------------------------
def cv_squared(v):
    eps = 1e-10
    v = v.astype(jnp.float32)
    if v.shape[0] == 1:                                 # static shape check
        return jnp.zeros((), jnp.float32)
    # torch.var() defaults to the unbiased estimator (ddof=1)
    return jnp.var(v, ddof=1) / (jnp.mean(v) ** 2 + eps)


def _route(x, params, k):
    """Noiseless top-k router (inference path).  Stays in XLA where the tiny
    (B,F)x(F,E) projection fuses with mean/reshape/top_k.
    TODO(synk): the reference MultiScaleRouter's seasonality/trend FFT
    decomposition is unspecified; a mean-pooled linear gate is used instead."""
    B, L, N, D = x.shape
    feat = x.mean(axis=2).reshape(B, L * D).astype(jnp.float32)
    logits = feat @ params["w_gate"] + params["b_gate"]            # [B, E]
    top_vals, top_idx = jax.lax.top_k(logits, k)
    top_gates = jax.nn.softmax(top_vals, axis=-1).astype(jnp.float32)
    return logits, top_idx.astype(jnp.int32), top_gates


def adaptive_multi_scale_forward(x, params, *, k, residual_connection=True,
                                 loss_coef=0.01):
    """x: [B, L, N, D] float32.  Returns (output [B, L, N, D], balance_loss)."""
    B, L, N, D = x.shape

    logits, top_idx, top_gates = _route(x, params, k)

    gates = jnp.zeros_like(logits).at[
        jnp.arange(B)[:, None], top_idx].set(top_gates)            # [B, E]
    importance = gates.sum(axis=0)                                 # [E]
    load = (gates > 0).astype(jnp.float32).sum(axis=0)             # [E]
    balance_loss = (cv_squared(importance) + cv_squared(load)) * loss_coef

    # ---- SparseDispatcher dispatch -> experts -> combine ---------------------
    # Sparse formulation: only the k selected experts run per batch; the gate-
    # weighted sum equals the reference dispatch/combine.
    # TODO(synk): DualAttentionLayer (intra/inter-patch attention) internals
    # are unspecified; each expert is a per-expert position-wise FFN
    # (D -> d_ff -> D) with GELU.
    x_r = x.reshape(B, L * N, D)
    out_r = moe_topk_combine(top_idx, top_gates, x_r,
                             params["w1"], params["w2"],
                             residual=residual_connection)
    return out_r.reshape(B, L, N, D), balance_loss


# ----------------------------------------------------------------------------
# Deterministic parameter construction (weights pre-padded + pre-cast ONCE)
# ----------------------------------------------------------------------------
def init_params(key, *, seq_len, d_model, d_ff, num_experts):
    kg, k1, k2 = jax.random.split(key, 3)
    F = seq_len * d_model
    w1 = jax.random.normal(k1, (num_experts, d_model, d_ff), jnp.float32) \
        * (1.0 / d_model) ** 0.5
    w2 = jax.random.normal(k2, (num_experts, d_ff, d_model), jnp.float32) \
        * (1.0 / d_ff) ** 0.5
    # Pad d_ff to the 128-lane width and cast to bf16 once here (removes the
    # per-forward pad + cast HBM round trip).  Exact: padded h columns are
    # GELU(0)=0 and padded W2 rows are zero.
    dffp = _round_up(d_ff, 128)
    w1_p = jnp.pad(w1, ((0, 0), (0, 0), (0, dffp - d_ff))).astype(jnp.bfloat16)
    w2_p = jnp.pad(w2, ((0, 0), (0, dffp - d_ff), (0, 0))).astype(jnp.bfloat16)
    return {
        "w_gate": jax.random.normal(kg, (F, num_experts), jnp.float32) * 0.02,
        "b_gate": jnp.zeros((num_experts,), jnp.float32),
        "w1": w1_p,       # [E, D, Dffp] bf16
        "w2": w2_p,       # [E, Dffp, D] bf16
    }


# ----------------------------------------------------------------------------
# Pure-JAX reference for the sparse combine (same bf16 weights, f32 math)
# ----------------------------------------------------------------------------
def _moe_reference(top_idx, top_gates, x_r, w1_p, w2_p, residual):
    w1 = w1_p.astype(jnp.float32)
    w2 = w2_p.astype(jnp.float32)
    out = x_r if residual else jnp.zeros_like(x_r)
    for j in range(top_idx.shape[1]):
        w1_j = w1[top_idx[:, j]]                       # (B, D, Dffp)
        w2_j = w2[top_idx[:, j]]                       # (B, Dffp, D)
        h = jax.nn.gelu(jnp.einsum("brd,bdf->brf", x_r, w1_j))
        out = out + top_gates[:, j][:, None, None] * jnp.einsum(
            "brf,bfd->brd", h, w2_j)
    return out


if __name__ == "__main__":
    # Small config consistent with the module's __init__
    batch = 2
    seq_len = 16          # config.seq_len (input_size == output_size)
    num_nodes = 4         # config.num_nodes
    d_model = 32          # config.d_model
    d_ff = 64             # config.d_ff
    patch_size = [2, 4, 8]
    num_experts = len(patch_size)
    k = 2                 # config.k
    residual_connection = True

    key = jax.random.PRNGKey(0)
    kx, kp = jax.random.split(key)
    x = jax.random.normal(kx, (batch, seq_len, num_nodes, d_model), jnp.float32)
    params = init_params(kp, seq_len=seq_len, d_model=d_model, d_ff=d_ff,
                         num_experts=num_experts)

    output, balance_loss = adaptive_multi_scale_forward(
        x, params, k=k, residual_connection=residual_connection)
    jax.block_until_ready((output, balance_loss))

    assert output.shape == (batch, seq_len, num_nodes, d_model)
    assert output.dtype == jnp.float32
    assert balance_loss.shape == ()

    # Correctness check of the Pallas combine vs a pure-JAX f32 reference
    # (only bf16 activation/matmul rounding should differ).
    _, top_idx, top_gates = _route(x, params, k)
    ref = _moe_reference(top_idx, top_gates, x.reshape(batch, -1, d_model),
                         params["w1"], params["w2"], residual_connection)
    err = float(jnp.max(jnp.abs(output.reshape(batch, -1, d_model) - ref)))
    assert err < 0.15, f"max abs error vs reference too large: {err}"

    print("KERNEL_OK")
</pallas_src>

<mosaic_0001>
module attributes {stable_mosaic.version = 11 : i64} {
  func.func @_moe_topk_fused_kernel(%arg0: i32, %arg1: memref<2x2xi32, #tpu.memory_space<smem>>, %arg2: memref<2x2xf32, #tpu.memory_space<smem>>, %arg3: memref<1x64x32xf32, #tpu.memory_space<vmem>>, %arg4: memref<3x32x128xbf16, #tpu.memory_space<vmem>>, %arg5: memref<3x128x32xbf16, #tpu.memory_space<vmem>>, %arg6: memref<1x64x32xf32, #tpu.memory_space<vmem>>) attributes {dimension_semantics = [#tpu.dimension_semantics<parallel>], iteration_bounds = array<i64: 2>, scalar_prefetch = 1 : i64, scratch_operands = 0 : i64, tpu.core_type = #tpu.core_type<tc>, window_params = [{transform_indices = @transform_0, window_bounds = array<i64: 2, 2>}, {transform_indices = @transform_1, window_bounds = array<i64: 1, 64, 32>}, {pipeline_mode = #tpu.pipeline_mode<synchronous>, transform_indices = @transform_2, window_bounds = array<i64: 3, 32, 128>}, {pipeline_mode = #tpu.pipeline_mode<synchronous>, transform_indices = @transform_3, window_bounds = array<i64: 3, 128, 32>}, {transform_indices = @transform_4, window_bounds = array<i64: 1, 64, 32>}]} {
    %c0 = arith.constant 0 : index
    %c0_0 = arith.constant 0 : index
    %c0_1 = arith.constant 0 : index
    %0 = vector.load %arg3[%c0, %c0_0, %c0_1] : memref<1x64x32xf32, #tpu.memory_space<vmem>>, vector<1x64x32xf32>
    %1 = vector.shape_cast %0 : vector<1x64x32xf32> to vector<64x32xf32>
    %2 = arith.truncf %1 : vector<64x32xf32> to vector<64x32xbf16>
    %3 = arith.index_cast %arg0 : i32 to index
    %c0_2 = arith.constant 0 : index
    %4 = memref.load %arg1[%3, %c0_2] : memref<2x2xi32, #tpu.memory_space<smem>>
    %5 = arith.index_cast %4 : i32 to index
    %c0_3 = arith.constant 0 : index
    %c0_4 = arith.constant 0 : index
    %6 = vector.load %arg4[%5, %c0_3, %c0_4] : memref<3x32x128xbf16, #tpu.memory_space<vmem>>, vector<1x32x128xbf16>
    %7 = vector.shape_cast %6 : vector<1x32x128xbf16> to vector<32x128xbf16>
    %8 = arith.index_cast %arg0 : i32 to index
    %c1 = arith.constant 1 : index
    %9 = memref.load %arg1[%8, %c1] : memref<2x2xi32, #tpu.memory_space<smem>>
    %10 = arith.index_cast %9 : i32 to index
    %c0_5 = arith.constant 0 : index
    %c0_6 = arith.constant 0 : index
    %11 = vector.load %arg4[%10, %c0_5, %c0_6] : memref<3x32x128xbf16, #tpu.memory_space<vmem>>, vector<1x32x128xbf16>
    %12 = vector.shape_cast %11 : vector<1x32x128xbf16> to vector<32x128xbf16>
    %13 = tpu.concatenate %7, %12 in 1 : vector<32x128xbf16>, vector<32x128xbf16> -> vector<32x256xbf16>
    %14 = arith.index_cast %arg0 : i32 to index
    %c0_7 = arith.constant 0 : index
    %15 = memref.load %arg1[%14, %c0_7] : memref<2x2xi32, #tpu.memory_space<smem>>
    %16 = arith.index_cast %15 : i32 to index
    %c0_8 = arith.constant 0 : index
    %c0_9 = arith.constant 0 : index
    %17 = vector.load %arg5[%16, %c0_8, %c0_9] : memref<3x128x32xbf16, #tpu.memory_space<vmem>>, vector<1x128x32xbf16>
    %18 = vector.shape_cast %17 : vector<1x128x32xbf16> to vector<128x32xbf16>
    %19 = arith.index_cast %arg0 : i32 to index
    %c1_10 = arith.constant 1 : index
    %20 = memref.load %arg1[%19, %c1_10] : memref<2x2xi32, #tpu.memory_space<smem>>
    %21 = arith.index_cast %20 : i32 to index
    %c0_11 = arith.constant 0 : index
    %c0_12 = arith.constant 0 : index
    %22 = vector.load %arg5[%21, %c0_11, %c0_12] : memref<3x128x32xbf16, #tpu.memory_space<vmem>>, vector<1x128x32xbf16>
    %23 = vector.shape_cast %22 : vector<1x128x32xbf16> to vector<128x32xbf16>
    %24 = tpu.concatenate %18, %23 in 0 : vector<128x32xbf16>, vector<128x32xbf16> -> vector<256x32xbf16>
    %cst = arith.constant dense<0.000000e+00> : vector<64x256xf32>
    %25 = tpu.matmul %2, %13, %cst {dimension_numbers = #tpu.dot_dimension_numbers<[1], [0], [0], [1], [0, 0, 1, 1], [], []>} : vector<64x32xbf16>, vector<32x256xbf16>, vector<64x256xf32> -> vector<64x256xf32>
    %26 = arith.mulf %25, %25 : vector<64x256xf32>
    %27 = arith.mulf %25, %26 : vector<64x256xf32>
    %cst_13 = arith.constant 4.471500e-02 : f32
    %28 = vector.broadcast %cst_13 : f32 to vector<64x256xf32>
    %29 = arith.mulf %28, %27 : vector<64x256xf32>
    %30 = arith.addf %25, %29 : vector<64x256xf32>
    %cst_14 = arith.constant 0.797884583 : f32
    %31 = vector.broadcast %cst_14 : f32 to vector<64x256xf32>
    %32 = arith.mulf %31, %30 : vector<64x256xf32>
    %33 = math.tanh %32 : vector<64x256xf32>
    %cst_15 = arith.constant 1.000000e+00 : f32
    %34 = vector.broadcast %cst_15 : f32 to vector<64x256xf32>
    %35 = arith.addf %34, %33 : vector<64x256xf32>
    %cst_16 = arith.constant 5.000000e-01 : f32
    %36 = vector.broadcast %cst_16 : f32 to vector<64x256xf32>
    %37 = arith.mulf %36, %35 : vector<64x256xf32>
    %38 = arith.mulf %25, %37 : vector<64x256xf32>
    %39 = arith.index_cast %arg0 : i32 to index
    %c0_17 = arith.constant 0 : index
    %40 = memref.load %arg2[%39, %c0_17] : memref<2x2xf32, #tpu.memory_space<smem>>
    %41 = vector.broadcast %40 : f32 to vector<1x128xf32>
    %42 = arith.index_cast %arg0 : i32 to index
    %c1_18 = arith.constant 1 : index
    %43 = memref.load %arg2[%42, %c1_18] : memref<2x2xf32, #tpu.memory_space<smem>>
    %44 = vector.broadcast %43 : f32 to vector<1x128xf32>
    %45 = tpu.concatenate %41, %44 in 1 : vector<1x128xf32>, vector<1x128xf32> -> vector<1x256xf32>
    %46 = vector.broadcast %45 : vector<1x256xf32> to vector<64x256xf32>
    %47 = arith.mulf %38, %46 : vector<64x256xf32>
    %48 = arith.truncf %47 : vector<64x256xf32> to vector<64x256xbf16>
    %cst_19 = arith.constant dense<0.000000e+00> : vector<64x32xf32>
    %49 = tpu.matmul %48, %24, %cst_19 {dimension_numbers = #tpu.dot_dimension_numbers<[1], [0], [0], [1], [0, 0, 1, 1], [], []>} : vector<64x256xbf16>, vector<256x32xbf16>, vector<64x32xf32> -> vector<64x32xf32>
    %50 = arith.addf %49, %1 : vector<64x32xf32>
    %c0_20 = arith.constant 0 : index
    %c0_21 = arith.constant 0 : index
    %c0_22 = arith.constant 0 : index
    %51 = vector.load %arg6[%c0_20, %c0_21, %c0_22] : memref<1x64x32xf32, #tpu.memory_space<vmem>>, vector<1x64x32xf32>
    %52 = vector.shape_cast %51 : vector<1x64x32xf32> to vector<64x32xf32>
    %53 = vector.shape_cast %50 : vector<64x32xf32> to vector<1x64x32xf32>
    tpu.vector_store %arg6[%c0_20, %c0_21, %c0_22], %53 {strides = array<i32>} : memref<1x64x32xf32, #tpu.memory_space<vmem>>, vector<1x64x32xf32>,
    return
  }
  func.func @transform_0(%arg0: i32, %arg1: memref<2x2xi32, #tpu.memory_space<smem>>) -> (i32, i32) {
    %c0_i32 = arith.constant 0 : i32
    %c0_i32_0 = arith.constant 0 : i32
    %c0_i32_1 = arith.constant 0 : i32
    return %c0_i32, %c0_i32_0 : i32, i32
  }
  func.func @transform_1(%arg0: i32, %arg1: memref<2x2xi32, #tpu.memory_space<smem>>) -> (i32, i32, i32) {
    %c0_i32 = arith.constant 0 : i32
    %c0_i32_0 = arith.constant 0 : i32
    %c0_i32_1 = arith.constant 0 : i32
    return %arg0, %c0_i32, %c0_i32_0 : i32, i32, i32
  }
  func.func @transform_2(%arg0: i32, %arg1: memref<2x2xi32, #tpu.memory_space<smem>>) -> (i32, i32, i32) {
    %c0_i32 = arith.constant 0 : i32
    %c0_i32_0 = arith.constant 0 : i32
    %c0_i32_1 = arith.constant 0 : i32
    %c0_i32_2 = arith.constant 0 : i32
    return %c0_i32, %c0_i32_0, %c0_i32_1 : i32, i32, i32
  }
  func.func @transform_3(%arg0: i32, %arg1: memref<2x2xi32, #tpu.memory_space<smem>>) -> (i32, i32, i32) {
    %c0_i32 = arith.constant 0 : i32
    %c0_i32_0 = arith.constant 0 : i32
    %c0_i32_1 = arith.constant 0 : i32
    %c0_i32_2 = arith.constant 0 : i32
    return %c0_i32, %c0_i32_0, %c0_i32_1 : i32, i32, i32
  }
  func.func @transform_4(%arg0: i32, %arg1: memref<2x2xi32, #tpu.memory_space<smem>>) -> (i32, i32, i32) {
    %c0_i32 = arith.constant 0 : i32
    %c0_i32_0 = arith.constant 0 : i32
    %c0_i32_1 = arith.constant 0 : i32
    return %arg0, %c0_i32, %c0_i32_0 : i32, i32, i32
  }
}

</mosaic_0001>

<llo_original>
// kernel: tpu_custom_call.1
$region0: #{tpu_custom_call.1}
  #allocation0 [shape = 'u32[]', space=smem, size = 0x4, offset = 0x4, fixed_abs, tag = 'smem constant byte address 0x4 - core index']
  #allocation1 [shape = 'u32[144,128]{1,0:T(1,128)}', space=vmem, size = 0x12000, scoped, tag = 'internal scratch']
  #allocation2 [shape = 's32[1]{0}', space=sflag, size = 0x4, scoped, tag = 'scoped memory for tpu_custom_call.1']
  #allocation3 [shape = 'u8[1024]{0}', space=smem, size = 0x400, scoped, tag = 'prefetched SMEM operand 0']
  %s0 = inlined_call_operand.vmem [shape: s32[2,2], index: 0, kind: input, shape index: {}]
  %s1 = inlined_call_operand.vmem [shape: f32[2,2], index: 1, kind: input, shape index: {}]
  %s2 = inlined_call_operand.vmem [shape: f32[2,64,32], index: 2, kind: input, shape index: {}]
  %s3 = inlined_call_operand.vmem [shape: bf16[3,32,128], index: 3, kind: input, shape index: {}]
  %s4 = inlined_call_operand.vmem [shape: bf16[3,128,32], index: 4, kind: input, shape index: {}]
  %s5 = inlined_call_operand.vmem [shape: f32[2,64,32], index: 5, kind: output, shape index: {}]
  %s6 = sld [smem:[#allocation0]]
  $region53: #{tpu_custom_call.1} parent=0
    _
  %s8 = ssub.s32 1, %s6
  %s9 = scalar_select 0, %s8, %s6
  %s10 = sshll.u32 %s0, 4
  %s11 = int_to_ptr.vmem [resolvable:$true] %s10
  %13 = dma.vmem_to_smem %s11, 32, [#allocation3], [#allocation2]
  %14 = dma.done [#allocation2], 32
  %15 = sfence
  $region1: #{tpu_custom_call.1} parent=0
    #allocation4 [shape = 'u8[1024]{0}', space=smem, size = 0x400, scoped, tag = 'input window, operand 1, single buffered']
    #allocation5 [shape = 's32[2]{0}', space=sflag, size = 0x8, scoped, tag = 'scoped memory for tpu_custom_call.1']
    %16 = vsyncpa [#allocation5], 0
    loop: start=0, step=1, limit=4
    $region2: #{tpu_custom_call.1} parent=1 // loop_pre_header
      _
    $region3: #{tpu_custom_call.1} parent=1 // loop_header
      %s18 = sphi 0, %s22
      %p19 = scmp.ge.s32.totalorder %s18, 4
      %s26 = sphi 0, %s26
      %s28 = sphi 0, %s26
      %s29 = sphi 0, %s28
      %s43 = sphi 0, %s29
      %s49 = sphi 0, %s51
      %s52 = sphi 0, %s49
      %s53 = sphi 0, %s52
      %s69 = sphi 0, %s53
      %s73 = sphi 0, %s73
      %s75 = sphi 0, %s73
      %s76 = sphi 0, %s75
      %s90 = sphi 0, %s76
      %s94 = sphi 0, %s94
      %s96 = sphi 0, %s94
      %s97 = sphi 0, %s96
      %s111 = sphi 0, %s97
      %s117 = sphi 0, %s119
      %s120 = sphi 0, %s117
      %s121 = sphi 0, %s120
      %s137 = sphi 0, %s121
    $region4: #{tpu_custom_call.1} parent=1 // loop_header_branch
      %21 = sbr.rel (%p19) target = $region8
    $region5: #{tpu_custom_call.1} parent=1 // loop_body
      %s23 = ssub.s32 %s18, 1
      %s24 = ssub.s32 %s18, 2
      %s25 = sadd.s32 %s18, 1
      %s27 = sadd.s32 %s26, 1
      %p30 = scmp.eq.s32.totalorder %s18, 1
      %p31 = scmp.ne.s32.totalorder %s26, %s28
      %p32 = scmp.eq.s32.totalorder %s18, 0
      %p33 = por %p31, %p32
      %p34 = scmp.ne.s32.totalorder %s26, %s28
      %p35 = scmp.eq.s32.totalorder %s23, 1
      %p36 = por %p34, %p35
      %p37 = scmp.ne.s32.totalorder %s28, %s29
      %p38 = scmp.eq.s32.totalorder %s23, 0
      %p39 = por %p37, %p38
      %p40 = scmp.ne.s32.totalorder %s28, %s29
      %p41 = scmp.eq.s32.totalorder %s24, 1
      %p42 = por %p40, %p41
      %p44 = scmp.ne.s32.totalorder %s29, %s43
      %p45 = scmp.eq.s32.totalorder %s24, 0
      %p46 = por %p44, %p45
      %s47 = ssub.s32 %s18, %s25
      %p48 = scmp.eq.s32.totalorder %s47, 0
      %s50 = sadd.s32 %s49, 1
      %s51 = scalar_select %p48, %s49, %s50
      %p54 = pneg %p48
      %p55 = scmp.eq.s32.totalorder %s18, 1
      %p56 = por %p54, %p55
      %p57 = scmp.ne.s32.totalorder %s49, %s52
      %p58 = scmp.eq.s32.totalorder %s18, 0
      %p59 = por %p57, %p58
      %p60 = scmp.ne.s32.totalorder %s49, %s52
      %p61 = scmp.eq.s32.totalorder %s23, 1
      %p62 = por %p60, %p61
      %p63 = scmp.ne.s32.totalorder %s52, %s53
      %p64 = scmp.eq.s32.totalorder %s23, 0
      %p65 = por %p63, %p64
      %p66 = scmp.ne.s32.totalorder %s52, %s53
      %p67 = scmp.eq.s32.totalorder %s24, 1
      %p68 = por %p66, %p67
      %p70 = scmp.ne.s32.totalorder %s53, %s69
      %p71 = scmp.eq.s32.totalorder %s24, 0
      %p72 = por %p70, %p71
      %s74 = sadd.s32 %s73, 1
      %p77 = scmp.eq.s32.totalorder %s18, 1
      %p78 = scmp.ne.s32.totalorder %s73, %s75
      %p79 = scmp.eq.s32.totalorder %s18, 0
      %p80 = por %p78, %p79
      %p81 = scmp.ne.s32.totalorder %s73, %s75
      %p82 = scmp.eq.s32.totalorder %s23, 1
      %p83 = por %p81, %p82
      %p84 = scmp.ne.s32.totalorder %s75, %s76
      %p85 = scmp.eq.s32.totalorder %s23, 0
      %p86 = por %p84, %p85
      %p87 = scmp.ne.s32.totalorder %s75, %s76
      %p88 = scmp.eq.s32.totalorder %s24, 1
      %p89 = por %p87, %p88
      %p91 = scmp.ne.s32.totalorder %s76, %s90
      %p92 = scmp.eq.s32.totalorder %s24, 0
      %p93 = por %p91, %p92
      %s95 = sadd.s32 %s94, 1
      %p98 = scmp.eq.s32.totalorder %s18, 1
      %p99 = scmp.ne.s32.totalorder %s94, %s96
      %p100 = scmp.eq.s32.totalorder %s18, 0
      %p101 = por %p99, %p100
      %p102 = scmp.ne.s32.totalorder %s94, %s96
      %p103 = scmp.eq.s32.totalorder %s23, 1
      %p104 = por %p102, %p103
      %p105 = scmp.ne.s32.totalorder %s96, %s97
      %p106 = scmp.eq.s32.totalorder %s23, 0
      %p107 = por %p105, %p106
      %p108 = scmp.ne.s32.totalorder %s96, %s97
      %p109 = scmp.eq.s32.totalorder %s24, 1
      %p110 = por %p108, %p109
      %p112 = scmp.ne.s32.totalorder %s97, %s111
      %p113 = scmp.eq.s32.totalorder %s24, 0
      %p114 = por %p112, %p113
      %s115 = ssub.s32 %s18, %s25
      %p116 = scmp.eq.s32.totalorder %s115, 0
      %s118 = sadd.s32 %s117, 1
      %s119 = scalar_select %p116, %s117, %s118
      %p122 = pneg %p116
      %p123 = scmp.eq.s32.totalorder %s18, 1
      %p124 = por %p122, %p123
      %p125 = scmp.ne.s32.totalorder %s117, %s120
      %p126 = scmp.eq.s32.totalorder %s18, 0
      %p127 = por %p125, %p126
      %p128 = scmp.ne.s32.totalorder %s117, %s120
      %p129 = scmp.eq.s32.totalorder %s23, 1
      %p130 = por %p128, %p129
      %p131 = scmp.ne.s32.totalorder %s120, %s121
      %p132 = scmp.eq.s32.totalorder %s23, 0
      %p133 = por %p131, %p132
      %p134 = scmp.ne.s32.totalorder %s120, %s121
      %p135 = scmp.eq.s32.totalorder %s24, 1
      %p136 = por %p134, %p135
      %p138 = scmp.ne.s32.totalorder %s121, %s137
      %p139 = scmp.eq.s32.totalorder %s24, 0
      %p140 = por %p138, %p139
      %p141 = scmp.le.s32.totalorder 1, %s18
      %p142 = scmp.lt.s32.totalorder %s18, 3
      %p143 = pnand %p141, %p142
      %p144 = pneg %p143
      // Predicated region
      $region9: #{tpu_custom_call.1} parent=5 // pred_check
        _
      $region10: #{tpu_custom_call.1} parent=5 // pred_check_branch
        %146 = sbr.rel (%p143) target = $region12
      $region11: #{tpu_custom_call.1} parent=5 // pred_region
        %s147 = ssub.s32 %s18, 1
        // Predicated region
        $region13: #{tpu_custom_call.1} parent=11 // pred_check
          %p148 = pneg %p39
        $region14: #{tpu_custom_call.1} parent=11 // pred_check_branch
          %150 = sbr.rel (%p148) target = $region16
        $region15: #{tpu_custom_call.1} parent=11 // pred_region
          %s152 = ssub.s32 32, 32
          %153 = vsyncadd [#allocation5], %s152
          %s155 = sshll.u32 %s1, 4
          %s156 = int_to_ptr.vmem [resolvable:$true] %s155
          %158 = dma.vmem_to_smem %s156, 32, [#allocation4], [#allocation5]
        $region16: #{tpu_custom_call.1} parent=11 // pred_fallthru
          _
        // Predicated region
        $region17: #{tpu_custom_call.1} parent=11 // pred_check
          %p159 = pneg %p86
        $region18: #{tpu_custom_call.1} parent=11 // pred_check_branch
          %161 = sbr.rel (%p159) target = $region20
        $region19: #{tpu_custom_call.1} parent=11 // pred_region
          _
        $region20: #{tpu_custom_call.1} parent=11 // pred_fallthru
          _
        // Predicated region
        $region21: #{tpu_custom_call.1} parent=11 // pred_check
          %p162 = pneg %p107
        $region22: #{tpu_custom_call.1} parent=11 // pred_check_branch
          %164 = sbr.rel (%p162) target = $region24
        $region23: #{tpu_custom_call.1} parent=11 // pred_region
          _
        $region24: #{tpu_custom_call.1} parent=11 // pred_fallthru
          _
      $region12: #{tpu_custom_call.1} parent=5 // pred_fallthru
        _
      %p165 = scmp.lt.s32.totalorder %s18, 2
      // Predicated region
      $region25: #{tpu_custom_call.1} parent=5 // pred_check
        %p166 = pneg %p165
      $region26: #{tpu_custom_call.1} parent=5 // pred_check_branch
        %168 = sbr.rel (%p166) target = $region28
      $region27: #{tpu_custom_call.1} parent=5 // pred_region
        // Predicated region
        $region29: #{tpu_custom_call.1} parent=27 // pred_check
          %p169 = pneg %p59
        $region30: #{tpu_custom_call.1} parent=27 // pred_check_branch
          %171 = sbr.rel (%p169) target = $region32
        $region31: #{tpu_custom_call.1} parent=27 // pred_region
          %p172 = scmp.lt.s32.totalorder %s18, 1
          %s173 = scalar_select %p172, %s18, 1
          %s174 = smul.addr %s173, 8
          %s175 = smul.addr %s174, 8
          %s176 = scalar_lea.vmem %s2, %s175
        $region32: #{tpu_custom_call.1} parent=27 // pred_fallthru
          _
      $region28: #{tpu_custom_call.1} parent=5 // pred_fallthru
        _
      %p177 = scmp.le.s32.totalorder 1, %s18
      %p178 = scmp.lt.s32.totalorder %s18, 3
      %p179 = pnand %p177, %p178
      %p180 = pneg %p179
      // Predicated region
      $region33: #{tpu_custom_call.1} parent=5 // pred_check
        _
      $region34: #{tpu_custom_call.1} parent=5 // pred_check_branch
        %182 = sbr.rel (%p179) target = $region36
      $region35: #{tpu_custom_call.1} parent=5 // pred_region
        %s183 = ssub.s32 %s18, 1
        // Predicated region
        $region37: #{tpu_custom_call.1} parent=35 // pred_check
          %p184 = pneg %p39
        $region38: #{tpu_custom_call.1} parent=35 // pred_check_branch
          %186 = sbr.rel (%p184) target = $region40
        $region39: #{tpu_custom_call.1} parent=35 // pred_region
          %187 = dma.done [#allocation5], 32
        $region40: #{tpu_custom_call.1} parent=35 // pred_fallthru
          _
        %188 = sfence
        %p189 = pneg %p39
        %p190 = pneg %p36
        %p191 = scmp.lt.s32.totalorder %s23, 1
        %s192 = scalar_select %p191, %s23, 1
        %s193 = smul.addr %s192, 8
        %s194 = smul.addr %s193, 8
        %s195 = scalar_lea.vmem %s2, %s194
        %p196 = pneg %p65
        %p197 = pneg %p62
        %p198 = pneg %p86
        %p199 = pneg %p83
        %p200 = pneg %p107
        %p201 = pneg %p104
        %p202 = pneg %p133
        %p203 = pneg %p130
        %p204 = scmp.lt.s32.totalorder %s23, 1
        %s205 = scalar_select %p204, %s23, 1
        %s206 = smul.addr %s205, 8
        %s207 = smul.addr %s206, 8
        %s208 = scalar_lea.vmem %s5, %s207
        %p209 = scmp.lt.s32.totalorder %s23, 1
        %s210 = scalar_select %p209, %s23, 1
        %s211 = smul.addr %s210, 8
        %s212 = smul.addr %s211, 8
        %s213 = scalar_lea.vmem %s2, %s212
        %p214 = scmp.lt.s32.totalorder %s23, 1
        %s215 = scalar_select %p214, %s23, 1
        %s216 = smul.addr %s215, 8
        %s217 = smul.addr %s216, 8
        %s218 = scalar_lea.vmem %s5, %s217
        %v220 = vld [vmem:[%s213] sm:$0xff]
        %v221 = vld [vmem:[%s213 + $0x8] sm:$0xff]
        %v222 = vld [vmem:[%s213 + $0x10] sm:$0xff]
        %v223 = vld [vmem:[%s213 + $0x18] sm:$0xff]
        %v224 = vld [vmem:[%s213 + $0x20] sm:$0xff]
        %v225 = vld [vmem:[%s213 + $0x28] sm:$0xff]
        %v226 = vld [vmem:[%s213 + $0x30] sm:$0xff]
        %v227 = vld [vmem:[%s213 + $0x38] sm:$0xff]
        %v228 = vpack.c.bf16 %v221, %v220
        %v229 = vpack.c.bf16 %v223, %v222
        %v230 = vpack.c.bf16 %v225, %v224
        %v231 = vpack.c.bf16 %v227, %v226
        %s232 = smul.u32 %s23, 128
        %s233 = sld [smem:[#allocation3 + %s232]]
        %s234 = smul.u32 %s233, 4
        %s235 = smul.addr %s234, 4
        %s236 = scalar_lea.vmem %s3, %s235
        %v237 = vld [vmem:[%s236] sm:$0xf]
        %v238 = vld [vmem:[%s236 + $0x4] sm:$0xf]
        %v239 = vld [vmem:[%s236 + $0x8] sm:$0xf]
        %v240 = vld [vmem:[%s236 + $0xc] sm:$0xf]
        %s241 = sadd.s32 %s232, 1
        %s242 = sld [smem:[#allocation3 + %s241]]
        %s243 = smul.u32 %s242, 4
        %s244 = smul.addr %s243, 4
        %s245 = scalar_lea.vmem %s3, %s244
        %v246 = vld [vmem:[%s245] sm:$0xf]
        %v247 = vld [vmem:[%s245 + $0x4] sm:$0xf]
        %v248 = vld [vmem:[%s245 + $0x8] sm:$0xf]
        %v249 = vld [vmem:[%s245 + $0xc] sm:$0xf]
        %v254 = vunpack.c.l.b16 %v237
        %v255 = vunpack.c.l.b16 %v238
        %v256 = vunpack.c.l.b16 %v239
        %v257 = vunpack.c.l.b16 %v240
        %v258 = vpack.c.b16 %v255, %v254
        %v259 = vpack.c.b16 %v257, %v256
        %v266 = vunpack.c.l.b16 %v246
        %v267 = vunpack.c.l.b16 %v247
        %v268 = vunpack.c.l.b16 %v248
        %v269 = vunpack.c.l.b16 %v249
        %v270 = vpack.c.b16 %v267, %v266
        %v271 = vpack.c.b16 %v269, %v268
        %s274 = smul.u32 %s233, 16
        %s275 = smul.addr %s274, 4
        %s276 = scalar_lea.vmem %s4, %s275
        %v277 = vld [vmem:[%s276] sm:$0xf]
        %v278 = vld [vmem:[%s276 + $0x4] sm:$0xf]
        %v279 = vld [vmem:[%s276 + $0x8] sm:$0xf]
        %v280 = vld [vmem:[%s276 + $0xc] sm:$0xf]
        %v281 = vld [vmem:[%s276 + $0x10] sm:$0xf]
        %v282 = vld [vmem:[%s276 + $0x14] sm:$0xf]
        %v283 = vld [vmem:[%s276 + $0x18] sm:$0xf]
        %v284 = vld [vmem:[%s276 + $0x1c] sm:$0xf]
        %v285 = vld [vmem:[%s276 + $0x20] sm:$0xf]
        %v286 = vld [vmem:[%s276 + $0x24] sm:$0xf]
        %v287 = vld [vmem:[%s276 + $0x28] sm:$0xf]
        %v288 = vld [vmem:[%s276 + $0x2c] sm:$0xf]
        %v289 = vld [vmem:[%s276 + $0x30] sm:$0xf]
        %v290 = vld [vmem:[%s276 + $0x34] sm:$0xf]
        %v291 = vld [vmem:[%s276 + $0x38] sm:$0xf]
        %v292 = vld [vmem:[%s276 + $0x3c] sm:$0xf]
        %s293 = smul.u32 %s242, 16
        %s294 = smul.addr %s293, 4
        %s295 = scalar_lea.vmem %s4, %s294
        %v296 = vld [vmem:[%s295] sm:$0xf]
        %v297 = vld [vmem:[%s295 + $0x4] sm:$0xf]
        %v298 = vld [vmem:[%s295 + $0x8] sm:$0xf]
        %v299 = vld [vmem:[%s295 + $0xc] sm:$0xf]
        %v300 = vld [vmem:[%s295 + $0x10] sm:$0xf]
        %v301 = vld [vmem:[%s295 + $0x14] sm:$0xf]
        %v302 = vld [vmem:[%s295 + $0x18] sm:$0xf]
        %v303 = vld [vmem:[%s295 + $0x1c] sm:$0xf]
        %v304 = vld [vmem:[%s295 + $0x20] sm:$0xf]
        %v305 = vld [vmem:[%s295 + $0x24] sm:$0xf]
        %v306 = vld [vmem:[%s295 + $0x28] sm:$0xf]
        %v307 = vld [vmem:[%s295 + $0x2c] sm:$0xf]
        %v308 = vld [vmem:[%s295 + $0x30] sm:$0xf]
        %v309 = vld [vmem:[%s295 + $0x34] sm:$0xf]
        %v310 = vld [vmem:[%s295 + $0x38] sm:$0xf]
        %v311 = vld [vmem:[%s295 + $0x3c] sm:$0xf]
        %v328 = vunpack.c.l.b16 %v277
        %v329 = vunpack.c.l.b16 %v278
        %v330 = vunpack.c.l.b16 %v279
        %v331 = vunpack.c.l.b16 %v280
        %v332 = vunpack.c.l.b16 %v281
        %v333 = vunpack.c.l.b16 %v282
        %v334 = vunpack.c.l.b16 %v283
        %v335 = vunpack.c.l.b16 %v284
        %v336 = vunpack.c.l.b16 %v285
        %v337 = vunpack.c.l.b16 %v286
        %v338 = vunpack.c.l.b16 %v287
        %v339 = vunpack.c.l.b16 %v288
        %v340 = vunpack.c.l.b16 %v289
        %v341 = vunpack.c.l.b16 %v290
        %v342 = vunpack.c.l.b16 %v291
        %v343 = vunpack.c.l.b16 %v292
        %v344 = vpack.c.b16 %v329, %v328
        %v345 = vpack.c.b16 %v331, %v330
        %v346 = vpack.c.b16 %v333, %v332
        %v347 = vpack.c.b16 %v335, %v334
        %v348 = vpack.c.b16 %v337, %v336
        %v349 = vpack.c.b16 %v339, %v338
        %v350 = vpack.c.b16 %v341, %v340
        %v351 = vpack.c.b16 %v343, %v342
        %v376 = vunpack.c.l.b16 %v296
        %v377 = vunpack.c.l.b16 %v297
        %v378 = vunpack.c.l.b16 %v298
        %v379 = vunpack.c.l.b16 %v299
        %v380 = vunpack.c.l.b16 %v300
        %v381 = vunpack.c.l.b16 %v301
        %v382 = vunpack.c.l.b16 %v302
        %v383 = vunpack.c.l.b16 %v303
        %v384 = vunpack.c.l.b16 %v304
        %v385 = vunpack.c.l.b16 %v305
        %v386 = vunpack.c.l.b16 %v306
        %v387 = vunpack.c.l.b16 %v307
        %v388 = vunpack.c.l.b16 %v308
        %v389 = vunpack.c.l.b16 %v309
        %v390 = vunpack.c.l.b16 %v310
        %v391 = vunpack.c.l.b16 %v311
        %v392 = vpack.c.b16 %v377, %v376
        %v393 = vpack.c.b16 %v379, %v378
        %v394 = vpack.c.b16 %v381, %v380
        %v395 = vpack.c.b16 %v383, %v382
        %v396 = vpack.c.b16 %v385, %v384
        %v397 = vpack.c.b16 %v387, %v386
        %v398 = vpack.c.b16 %v389, %v388
        %v399 = vpack.c.b16 %v391, %v390
        %vm408 = vcmask 261120
        %v410 = vsel %vm408, %v228, 0
        %v413 = vsel %vm408, %v229, 0
        %v416 = vsel %vm408, %v230, 0
        %v419 = vsel %vm408, %v231, 0
        %421 = vmatprep.subr.bf16.mxu0 %v270
        %422 = vmatpush1.bf16.msra.mxu0 %v258
        %423 = vmatprep.subr.bf16.mxu0 %v271
        %424 = vmatpush1.bf16.msra.mxu0 %v259
        %425 = vmatprep.subr.bf16.mxu0 0
        %426 = vmatpush1.bf16.msra.mxu0 0
        %427 = vmatprep.subr.bf16.mxu0 0
        %428 = vmatpush1.bf16.msra.mxu0 0
        %429 = vmatprep.subr.bf16.mxu0 0
        %430 = vmatpush1.bf16.msra.mxu0 0
        %431 = vmatprep.subr.bf16.mxu0 0
        %432 = vmatpush1.bf16.msra.mxu0 0
        %433 = vmatprep.subr.bf16.mxu0 0
        %434 = vmatpush1.bf16.msra.mxu0 0
        %435 = vmatprep.subr.bf16.mxu0 0
        %436 = vmatpush1.bf16.msra.mxu0 0
        %437 = vmatprep.subr.bf16.mxu0 0
        %438 = vmatpush1.bf16.msra.mxu0 0
        %439 = vmatprep.subr.bf16.mxu0 0
        %440 = vmatpush1.bf16.msra.mxu0 0
        %441 = vmatprep.subr.bf16.mxu0 0
        %442 = vmatpush1.bf16.msra.mxu0 0
        %443 = vmatprep.subr.bf16.mxu0 0
        %444 = vmatpush1.bf16.msra.mxu0 0
        %445 = vmatprep.subr.bf16.mxu0 0
        %446 = vmatpush1.bf16.msra.mxu0 0
        %447 = vmatprep.subr.bf16.mxu0 0
        %448 = vmatpush1.bf16.msra.mxu0 0
        %449 = vmatprep.subr.bf16.mxu0 0
        %450 = vmatpush1.bf16.msra.mxu0 0
        %451 = vmatprep.subr.bf16.mxu0 0
        %452 = vmatpush1.bf16.msra.mxu0 0
        %453 = vmatprep.mubr.bf16.mxu0 0
        %454 = vmatmul.mubr.bf16.gmra.mrb[0].mxu0 %v410
        %v455 = vpop.f32.mrb[0].mxu0
        %v456 = vadd.f32 0.0, %v455
        %v457 = vpop.f32.mrb[0].mxu0
        %v458 = vadd.f32 0.0, %v457
        %v459 = vpop.f32.mrb[0].mxu0
        %v460 = vadd.f32 0.0, %v459
        %v461 = vpop.f32.mrb[0].mxu0
        %v462 = vadd.f32 0.0, %v461
        %463 = vmatprep.mubr.bf16.mxu0 0
        %464 = vmatmul.mubr.bf16.gmra.mrb[0].mxu0 %v413
        %v465 = vpop.f32.mrb[0].mxu0
        %v466 = vadd.f32 0.0, %v465
        %v467 = vpop.f32.mrb[0].mxu0
        %v468 = vadd.f32 0.0, %v467
        %v469 = vpop.f32.mrb[0].mxu0
        %v470 = vadd.f32 0.0, %v469
        %v471 = vpop.f32.mrb[0].mxu0
        %v472 = vadd.f32 0.0, %v471
        %473 = vmatprep.mubr.bf16.mxu0 0
        %474 = vmatmul.mubr.bf16.gmra.mrb[0].mxu0 %v416
        %v475 = vpop.f32.mrb[0].mxu0
        %v476 = vadd.f32 0.0, %v475
        %v477 = vpop.f32.mrb[0].mxu0
        %v478 = vadd.f32 0.0, %v477
        %v479 = vpop.f32.mrb[0].mxu0
        %v480 = vadd.f32 0.0, %v479
        %v481 = vpop.f32.mrb[0].mxu0
        %v482 = vadd.f32 0.0, %v481
        %483 = vmatprep.mubr.bf16.mxu0 0
        %484 = vmatmul.mubr.bf16.gmra.mrb[0].mxu0 %v419
        %v485 = vpop.f32.mrb[0].mxu0
        %v486 = vadd.f32 0.0, %v485
        %v487 = vpop.f32.mrb[0].mxu0
        %v488 = vadd.f32 0.0, %v487
        %v489 = vpop.f32.mrb[0].mxu0
        %v490 = vadd.f32 0.0, %v489
        %v491 = vpop.f32.mrb[0].mxu0
        %v492 = vadd.f32 0.0, %v491
        %493 = vdwg.mxu0
        %v494 = vmul.f32 %v456, %v456
        %v495 = vmul.f32 %v458, %v458
        %v496 = vmul.f32 %v460, %v460
        %v497 = vmul.f32 %v462, %v462
        %v498 = vmul.f32 %v466, %v466
        %v499 = vmul.f32 %v468, %v468
        %v500 = vmul.f32 %v470, %v470
        %v501 = vmul.f32 %v472, %v472
        %v502 = vmul.f32 %v476, %v476
        %v503 = vmul.f32 %v478, %v478
        %v504 = vmul.f32 %v480, %v480
        %v505 = vmul.f32 %v482, %v482
        %v506 = vmul.f32 %v486, %v486
        %v507 = vmul.f32 %v488, %v488
        %v508 = vmul.f32 %v490, %v490
        %v509 = vmul.f32 %v492, %v492
        %v510 = vmul.f32 %v456, %v494
        %v511 = vmul.f32 %v458, %v495
        %v512 = vmul.f32 %v460, %v496
        %v513 = vmul.f32 %v462, %v497
        %v514 = vmul.f32 %v466, %v498
        %v515 = vmul.f32 %v468, %v499
        %v516 = vmul.f32 %v470, %v500
        %v517 = vmul.f32 %v472, %v501
        %v518 = vmul.f32 %v476, %v502
        %v519 = vmul.f32 %v478, %v503
        %v520 = vmul.f32 %v480, %v504
        %v521 = vmul.f32 %v482, %v505
        %v522 = vmul.f32 %v486, %v506
        %v523 = vmul.f32 %v488, %v507
        %v524 = vmul.f32 %v490, %v508
        %v525 = vmul.f32 %v492, %v509
        %v526 = vmul.f32 %v510, 0.044715
        %v527 = vmul.f32 %v511, 0.044715
        %v528 = vmul.f32 %v512, 0.044715
        %v529 = vmul.f32 %v513, 0.044715
        %v530 = vmul.f32 %v514, 0.044715
        %v531 = vmul.f32 %v515, 0.044715
        %v532 = vmul.f32 %v516, 0.044715
        %v533 = vmul.f32 %v517, 0.044715
        %v534 = vmul.f32 %v518, 0.044715
        %v535 = vmul.f32 %v519, 0.044715
        %v536 = vmul.f32 %v520, 0.044715
        %v537 = vmul.f32 %v521, 0.044715
        %v538 = vmul.f32 %v522, 0.044715
        %v539 = vmul.f32 %v523, 0.044715
        %v540 = vmul.f32 %v524, 0.044715
        %v541 = vmul.f32 %v525, 0.044715
        %v542 = vadd.f32 %v456, %v526
        %v543 = vadd.f32 %v458, %v527
        %v544 = vadd.f32 %v460, %v528
        %v545 = vadd.f32 %v462, %v529
        %v546 = vadd.f32 %v466, %v530
        %v547 = vadd.f32 %v468, %v531
        %v548 = vadd.f32 %v470, %v532
        %v549 = vadd.f32 %v472, %v533
        %v550 = vadd.f32 %v476, %v534
        %v551 = vadd.f32 %v478, %v535
        %v552 = vadd.f32 %v480, %v536
        %v553 = vadd.f32 %v482, %v537
        %v554 = vadd.f32 %v486, %v538
        %v555 = vadd.f32 %v488, %v539
        %v556 = vadd.f32 %v490, %v540
        %v557 = vadd.f32 %v492, %v541
        %v558 = vmul.f32 %v542, 0.7978846
        %v559 = vmul.f32 %v543, 0.7978846
        %v560 = vmul.f32 %v544, 0.7978846
        %v561 = vmul.f32 %v545, 0.7978846
        %v562 = vmul.f32 %v546, 0.7978846
        %v563 = vmul.f32 %v547, 0.7978846
        %v564 = vmul.f32 %v548, 0.7978846
        %v565 = vmul.f32 %v549, 0.7978846
        %v566 = vmul.f32 %v550, 0.7978846
        %v567 = vmul.f32 %v551, 0.7978846
        %v568 = vmul.f32 %v552, 0.7978846
        %v569 = vmul.f32 %v553, 0.7978846
        %v570 = vmul.f32 %v554, 0.7978846
        %v571 = vmul.f32 %v555, 0.7978846
        %v572 = vmul.f32 %v556, 0.7978846
        %v573 = vmul.f32 %v557, 0.7978846
        %v574 = vtanh.pop %v558
        %v575 = vtanh.pop %v559
        %v576 = vtanh.pop %v560
        %v577 = vtanh.pop %v561
        %v578 = vtanh.pop %v562
        %v579 = vtanh.pop %v563
        %v580 = vtanh.pop %v564
        %v581 = vtanh.pop %v565
        %v582 = vtanh.pop %v566
        %v583 = vtanh.pop %v567
        %v584 = vtanh.pop %v568
        %v585 = vtanh.pop %v569
        %v586 = vtanh.pop %v570
        %v587 = vtanh.pop %v571
        %v588 = vtanh.pop %v572
        %v589 = vtanh.pop %v573
        %v590 = vadd.f32 %v574, 1.0
        %v591 = vadd.f32 %v575, 1.0
        %v592 = vadd.f32 %v576, 1.0
        %v593 = vadd.f32 %v577, 1.0
        %v594 = vadd.f32 %v578, 1.0
        %v595 = vadd.f32 %v579, 1.0
        %v596 = vadd.f32 %v580, 1.0
        %v597 = vadd.f32 %v581, 1.0
        %v598 = vadd.f32 %v582, 1.0
        %v599 = vadd.f32 %v583, 1.0
        %v600 = vadd.f32 %v584, 1.0
        %v601 = vadd.f32 %v585, 1.0
        %v602 = vadd.f32 %v586, 1.0
        %v603 = vadd.f32 %v587, 1.0
        %v604 = vadd.f32 %v588, 1.0
        %v605 = vadd.f32 %v589, 1.0
        %v606 = vmul.f32 %v590, 0.5
        %v607 = vmul.f32 %v591, 0.5
        %v608 = vmul.f32 %v592, 0.5
        %v609 = vmul.f32 %v593, 0.5
        %v610 = vmul.f32 %v594, 0.5
        %v611 = vmul.f32 %v595, 0.5
        %v612 = vmul.f32 %v596, 0.5
        %v613 = vmul.f32 %v597, 0.5
        %v614 = vmul.f32 %v598, 0.5
        %v615 = vmul.f32 %v599, 0.5
        %v616 = vmul.f32 %v600, 0.5
        %v617 = vmul.f32 %v601, 0.5
        %v618 = vmul.f32 %v602, 0.5
        %v619 = vmul.f32 %v603, 0.5
        %v620 = vmul.f32 %v604, 0.5
        %v621 = vmul.f32 %v605, 0.5
        %v622 = vmul.f32 %v456, %v606
        %v623 = vmul.f32 %v458, %v607
        %v624 = vmul.f32 %v460, %v608
        %v625 = vmul.f32 %v462, %v609
        %v626 = vmul.f32 %v466, %v610
        %v627 = vmul.f32 %v468, %v611
        %v628 = vmul.f32 %v470, %v612
        %v629 = vmul.f32 %v472, %v613
        %v630 = vmul.f32 %v476, %v614
        %v631 = vmul.f32 %v478, %v615
        %v632 = vmul.f32 %v480, %v616
        %v633 = vmul.f32 %v482, %v617
        %v634 = vmul.f32 %v486, %v618
        %v635 = vmul.f32 %v488, %v619
        %v636 = vmul.f32 %v490, %v620
        %v637 = vmul.f32 %v492, %v621
        %s638 = sld [smem:[#allocation4 + %s232]]
        %v639 = vstv %s638
        %s640 = sld [smem:[#allocation4 + %s241]]
        %v641 = vstv %s640
        %v642 = vlaneseq
        %v643 = vshrl.u32 %v642, 7
        %v644 = vsub.s32 0, %v643
        %v645 = vlaneseq
        %v646 = vshrl.u32 %v645, 7
        %v647 = vsub.s32 0, %v646
        %v648 = vmul.f32 %v622, %v639
        %v649 = vmul.f32 %v623, %v641
        %v650 = vmul.f32 %v624, %v639
        %v651 = vmul.f32 %v625, %v641
        %v652 = vmul.f32 %v626, %v639
        %v653 = vmul.f32 %v627, %v641
        %v654 = vmul.f32 %v628, %v639
        %v655 = vmul.f32 %v629, %v641
        %v656 = vmul.f32 %v630, %v639
        %v657 = vmul.f32 %v631, %v641
        %v658 = vmul.f32 %v632, %v639
        %v659 = vmul.f32 %v633, %v641
        %v660 = vmul.f32 %v634, %v639
        %v661 = vmul.f32 %v635, %v641
        %v662 = vmul.f32 %v636, %v639
        %v663 = vmul.f32 %v637, %v641
        %v664 = vpack.c.bf16 %v650, %v648
        %v665 = vpack.c.bf16 %v651, %v649
        %v666 = vpack.c.bf16 %v654, %v652
        %v667 = vpack.c.bf16 %v655, %v653
        %v668 = vpack.c.bf16 %v658, %v656
        %v669 = vpack.c.bf16 %v659, %v657
        %v670 = vpack.c.bf16 %v662, %v660
        %v671 = vpack.c.bf16 %v663, %v661
        %672 = vmatprep.subr.bf16.mxu0 0
        %673 = vmatpush1.bf16.msra.mxu0 %v344
        %674 = vmatprep.subr.bf16.mxu0 0
        %675 = vmatpush1.bf16.msra.mxu0 %v345
        %676 = vmatprep.subr.bf16.mxu0 0
        %677 = vmatpush1.bf16.msra.mxu0 %v346
        %678 = vmatprep.subr.bf16.mxu0 0
        %679 = vmatpush1.bf16.msra.mxu0 %v347
        %680 = vmatprep.subr.bf16.mxu0 0
        %681 = vmatpush1.bf16.msra.mxu0 %v348
        %682 = vmatprep.subr.bf16.mxu0 0
        %683 = vmatpush1.bf16.msra.mxu0 %v349
        %684 = vmatprep.subr.bf16.mxu0 0
        %685 = vmatpush1.bf16.msra.mxu0 %v350
        %686 = vmatprep.subr.bf16.mxu0 0
        %687 = vmatpush1.bf16.msra.mxu0 %v351
        %688 = vmatprep.subr.bf16.mxu0 0
        %689 = vmatpush1.bf16.msra.mxu0 %v392
        %690 = vmatprep.subr.bf16.mxu0 0
        %691 = vmatpush1.bf16.msra.mxu0 %v393
        %692 = vmatprep.subr.bf16.mxu0 0
        %693 = vmatpush1.bf16.msra.mxu0 %v394
        %694 = vmatprep.subr.bf16.mxu0 0
        %695 = vmatpush1.bf16.msra.mxu0 %v395
        %696 = vmatprep.subr.bf16.mxu0 0
        %697 = vmatpush1.bf16.msra.mxu0 %v396
        %698 = vmatprep.subr.bf16.mxu0 0
        %699 = vmatpush1.bf16.msra.mxu0 %v397
        %700 = vmatprep.subr.bf16.mxu0 0
        %701 = vmatpush1.bf16.msra.mxu0 %v398
        %702 = vmatprep.subr.bf16.mxu0 0
        %703 = vmatpush1.bf16.msra.mxu0 %v399
        %704 = vmatprep.mubr.bf16.mxu0 %v665
        %705 = vmatmul.mubr.bf16.gmra.mrb[0].mxu0 %v664
        %v706 = vpop.f32.mrb[0].mxu0
        %v707 = vadd.f32 %v220, %v706
        %v708 = vpop.f32.mrb[0].mxu0
        %v709 = vpop.f32.mrb[0].mxu0
        %v710 = vadd.f32 %v221, %v709
        %v711 = vpop.f32.mrb[0].mxu0
        %712 = vmatprep.mubr.bf16.mxu0 %v667
        %713 = vmatmul.mubr.bf16.gmra.mrb[0].mxu0 %v666
        %v714 = vpop.f32.mrb[0].mxu0
        %v715 = vadd.f32 %v222, %v714
        %v716 = vpop.f32.mrb[0].mxu0
        %v717 = vpop.f32.mrb[0].mxu0
        %v718 = vadd.f32 %v223, %v717
        %v719 = vpop.f32.mrb[0].mxu0
        %720 = vmatprep.mubr.bf16.mxu0 %v669
        %721 = vmatmul.mubr.bf16.gmra.mrb[0].mxu0 %v668
        %v722 = vpop.f32.mrb[0].mxu0
        %v723 = vadd.f32 %v224, %v722
        %v724 = vpop.f32.mrb[0].mxu0
        %v725 = vpop.f32.mrb[0].mxu0
        %v726 = vadd.f32 %v225, %v725
        %v727 = vpop.f32.mrb[0].mxu0
        %728 = vmatprep.mubr.bf16.mxu0 %v671
        %729 = vmatmul.mubr.bf16.gmra.mrb[0].mxu0 %v670
        %v730 = vpop.f32.mrb[0].mxu0
        %v731 = vadd.f32 %v226, %v730
        %v732 = vpop.f32.mrb[0].mxu0
        %v733 = vpop.f32.mrb[0].mxu0
        %v734 = vadd.f32 %v227, %v733
        %v735 = vpop.f32.mrb[0].mxu0
        %736 = vdwg.mxu0
        %737 = vst.msk [vmem:[%s218] sm:$0xff] %vm408, %v707
        %738 = vst.msk [vmem:[%s218 + $0x8] sm:$0xff] %vm408, %v710
        %739 = vst.msk [vmem:[%s218 + $0x10] sm:$0xff] %vm408, %v715
        %740 = vst.msk [vmem:[%s218 + $0x18] sm:$0xff] %vm408, %v718
        %741 = vst.msk [vmem:[%s218 + $0x20] sm:$0xff] %vm408, %v723
        %742 = vst.msk [vmem:[%s218 + $0x28] sm:$0xff] %vm408, %v726
        %743 = vst.msk [vmem:[%s218 + $0x30] sm:$0xff] %vm408, %v731
        %744 = vst.msk [vmem:[%s218 + $0x38] sm:$0xff] %vm408, %v734
        %p745 = scmp.lt.s32.totalorder %s23, 1
        %s746 = scalar_select %p745, %s23, 1
        %s747 = smul.addr %s746, 8
        %s748 = smul.addr %s747, 8
        %s749 = scalar_lea.vmem %s5, %s748
        // Predicated region
        $region41: #{tpu_custom_call.1} parent=35 // pred_check
          %p750 = pneg %p130
        $region42: #{tpu_custom_call.1} parent=35 // pred_check_branch
          %752 = sbr.rel (%p750) target = $region44
        $region43: #{tpu_custom_call.1} parent=35 // pred_region
          _
        $region44: #{tpu_custom_call.1} parent=35 // pred_fallthru
          _
      $region36: #{tpu_custom_call.1} parent=5 // pred_fallthru
        _
      %p753 = scmp.le.s32.totalorder 2, %s18
      // Predicated region
      $region45: #{tpu_custom_call.1} parent=5 // pred_check
        %p754 = pneg %p753
      $region46: #{tpu_custom_call.1} parent=5 // pred_check_branch
        %756 = sbr.rel (%p754) target = $region48
      $region47: #{tpu_custom_call.1} parent=5 // pred_region
        %s757 = ssub.s32 %s18, 2
        // Predicated region
        $region49: #{tpu_custom_call.1} parent=47 // pred_check
          %p758 = pneg %p136
        $region50: #{tpu_custom_call.1} parent=47 // pred_check_branch
          %760 = sbr.rel (%p758) target = $region52
        $region51: #{tpu_custom_call.1} parent=47 // pred_region
          %p761 = scmp.lt.s32.totalorder %s24, 1
          %s762 = scalar_select %p761, %s24, 1
          %s763 = smul.addr %s762, 8
          %s764 = smul.addr %s763, 8
          %s765 = scalar_lea.vmem %s5, %s764
        $region52: #{tpu_custom_call.1} parent=47 // pred_fallthru
          _
      $region48: #{tpu_custom_call.1} parent=5 // pred_fallthru
        _
    $region6: #{tpu_custom_call.1} parent=1 // loop_footer
      %s22 = sadd.s32 1, %s18
    $region7: #{tpu_custom_call.1} parent=1 // loop_footer_branch
      %17 = sbr.rel target = $region3
    $region8: #{tpu_custom_call.1} parent=1 // loop_exit
      _
    %766 = vsyncpa [#allocation5], 1
    %s767 = scalar_lea.sflag [#allocation5], 1
    %768 = vsyncpa %s767, 1

</llo_original>
